<compile_context>
chip_gen: v7x
topology: tpu7x:2x2x1
jax: 0.10.0
libtpu: 0.0.40
codegen_flags: <defaults>
</compile_context>

<pallas_src>
import functools

import jax
import jax.numpy as jnp
from jax.experimental import pallas as pl
from jax.experimental.pallas import tpu as pltpu


def _layernorm_kernel(x_ref, gamma_ref, beta_ref, o_ref, *, eps):
    """Generic row LayerNorm: one logical row per block row (D >= 2)."""
    x = x_ref[...].astype(jnp.float32)            # (tr, D)
    d = x.shape[-1]
    mean = jnp.mean(x, axis=-1, keepdims=True)
    diff = x - mean
    # torch.std defaults to unbiased (ddof=1).
    var = jnp.sum(diff * diff, axis=-1, keepdims=True) * (1.0 / (d - 1))
    # Exact divide: (tr, 1) work, negligible, and accurate enough for 1e-4
    # parity (the approximate EUP reciprocal was not).
    inv = 1.0 / (jnp.sqrt(var) + jnp.float32(eps))
    out = (diff * inv * gamma_ref[...].astype(jnp.float32)
           + beta_ref[...].astype(jnp.float32))
    o_ref[...] = out.astype(o_ref.dtype)


def _layernorm_packed_kernel(x_ref, gamma_ref, beta_ref, o_ref, *, eps, d, fold):
    """Lane-dense LayerNorm for small hidden sizes.

    The wrapper packs `fold = 128 // d` consecutive logical rows into the lane
    axis, so each kernel row is `fold` independent d-wide segments and every
    load/store is a full 128-lane slab. Segmented reductions are done with
    lane masks (iota + where), which lower to plain VPU/XLU ops.
    """
    x = x_ref[...].astype(jnp.float32)            # (tr, fold * d)
    p = d * fold
    seg = jax.lax.broadcasted_iota(jnp.int32, (1, p), 1) // d   # lane -> segment id

    mean_b = jnp.zeros_like(x)
    for k in range(fold):                         # static unroll, fold is small
        in_seg = seg == k
        mk = jnp.sum(jnp.where(in_seg, x, 0.0), axis=-1, keepdims=True) * (1.0 / d)
        mean_b = jnp.where(in_seg, mk, mean_b)

    diff = x - mean_b
    inv_b = jnp.zeros_like(x)
    for k in range(fold):
        in_seg = seg == k
        vk = jnp.sum(jnp.where(in_seg, diff * diff, 0.0), axis=-1,
                     keepdims=True) * (1.0 / (d - 1))
        ik = 1.0 / (jnp.sqrt(vk) + jnp.float32(eps))   # exact; one value per segment
        inv_b = jnp.where(in_seg, ik, inv_b)

    out = (diff * inv_b * gamma_ref[...].astype(jnp.float32)
           + beta_ref[...].astype(jnp.float32))
    o_ref[...] = out.astype(o_ref.dtype)


def _pick_tile_rows(rows, width, itemsize):
    """Row-tile size: ~1-4 MiB blocks, fp32 temps budgeted, grid kept deep."""
    # Mem-bound roofline saturates around ~1 MiB blocks; bigger adds nothing.
    target_block_bytes = 2 * 1024 * 1024
    tr = target_block_bytes // max(width * itemsize, 1)
    # Budget: 2x double-buffered (in + out) blocks plus ~4 live fp32 temps per
    # row, kept under ~10 MiB so we fit the default scoped-VMEM limit on every
    # generation (16 MiB on v5e) without overriding vmem_limit_bytes.
    vmem_budget = 10 * 1024 * 1024
    per_row = 4 * width * itemsize + 4 * width * 4
    tr = min(tr, vmem_budget // max(per_row, 1))
    tr = max(8, min(int(tr), 2048))
    tr -= tr % 8                                   # sublane-aligned
    # Keep >= ~8 grid steps for anything larger than a couple of MiB so the
    # DMA pipeline has a steady state and v7x megacore can split the grid.
    if rows * width * itemsize > 2 * 1024 * 1024:
        cap = ((pl.cdiv(rows, 8) + 7) // 8) * 8
        tr = min(tr, max(cap, 8))
    if tr >= rows:
        return rows                                # full-extent block (small inputs)
    return tr


def _run_ln(kernel, x2, g2, b2, *, d_logical):
    rows, width = x2.shape
    itemsize = jnp.dtype(x2.dtype).itemsize
    tr = _pick_tile_rows(rows, width, itemsize)
    grid = (pl.cdiv(rows, tr),)                    # ragged last block handled by Pallas
    n_norm = rows * (width // d_logical)           # number of normalized rows

    cost = pl.CostEstimate(
        flops=8 * rows * width,
        transcendentals=2 * n_norm,                # sqrt + divide per row
        bytes_accessed=2 * rows * width * itemsize
        + 2 * width * jnp.dtype(g2.dtype).itemsize,
    )

    return pl.pallas_call(
        kernel,
        out_shape=jax.ShapeDtypeStruct((rows, width), x2.dtype),
        grid_spec=pltpu.PrefetchScalarGridSpec(
            num_scalar_prefetch=0,
            grid=grid,
            in_specs=[
                pl.BlockSpec((tr, width), lambda i: (i, 0)),
                pl.BlockSpec((1, width), lambda i: (0, 0)),   # gamma: VMEM-resident
                pl.BlockSpec((1, width), lambda i: (0, 0)),   # beta: VMEM-resident
            ],
            out_specs=pl.BlockSpec((tr, width), lambda i: (i, 0)),
        ),
        # Small blocks => default scoped-VMEM limit is plenty; no override.
        # (If profiling ever shows exposed DMA at these block sizes, add
        #  pipeline_mode=pl.Buffered(3) on the x BlockSpec.)
        compiler_params=pltpu.CompilerParams(dimension_semantics=("parallel",)),
        cost_estimate=cost,
    )(x2, g2, b2)


def layer_norm(x, gamma, beta, eps=1e-6):
    """LayerNorm over the last axis of x, matching the PyTorch module."""
    orig_shape = x.shape
    d = orig_shape[-1]
    x2 = x.reshape(-1, d)
    rows = x2.shape[0]

    gamma2 = gamma.reshape(1, d)
    beta2 = beta.reshape(1, d)

    # Lane-dense fast path for small hidden sizes (D < 128, D | 128): pack
    # fold rows per lane-slab. The reshapes below are contiguous => free.
    fold = 128 // d if (2 <= d < 128 and 128 % d == 0) else 1
    if fold > 1 and rows % fold == 0:
        xp = x2.reshape(rows // fold, fold * d)
        gp = jnp.tile(gamma2, (1, fold))
        bp = jnp.tile(beta2, (1, fold))
        kern = functools.partial(_layernorm_packed_kernel, eps=eps, d=d, fold=fold)
        try:
            out = _run_ln(kern, xp, gp, bp, d_logical=d).reshape(rows, d)
            return out.reshape(orig_shape)
        except Exception:
            # Safety net: if the packed kernel fails to lower on this Mosaic
            # version, fall back to the generic (masked-store) path below.
            pass

    kern = functools.partial(_layernorm_kernel, eps=eps)
    out = _run_ln(kern, x2, gamma2, beta2, d_logical=d)
    return out.reshape(orig_shape)


if __name__ == "__main__":
    key = jax.random.PRNGKey(0)
    batch, seq, hidden = 2, 8, 32

    x = jax.random.normal(key, (batch, seq, hidden), dtype=jnp.float32)
    # Deterministic parameter init matching nn.Parameter(torch.ones/zeros(features)).
    gamma = jnp.ones((hidden,), dtype=jnp.float32)
    beta = jnp.zeros((hidden,), dtype=jnp.float32)

    out = layer_norm(x, gamma, beta, eps=1e-6)
    out = jax.block_until_ready(out)

    # Reference in plain JAX (unbiased std, std + eps denominator).
    mean = jnp.mean(x, axis=-1, keepdims=True)
    std = jnp.sqrt(jnp.sum((x - mean) ** 2, axis=-1, keepdims=True) / (hidden - 1))
    ref = (x - mean) / (std + 1e-6) * gamma + beta
    assert jnp.allclose(out, ref, atol=1e-4, rtol=1e-4), "mismatch vs reference"

    print("KERNEL_OK")
</pallas_src>

<mosaic_0001>
module attributes {stable_mosaic.version = 11 : i64} {
  func.func @_layernorm_kernel(%arg0: i32, %arg1: memref<16x32xf32, #tpu.memory_space<vmem>>, %arg2: memref<1x32xf32, #tpu.memory_space<vmem>>, %arg3: memref<1x32xf32, #tpu.memory_space<vmem>>, %arg4: memref<16x32xf32, #tpu.memory_space<vmem>>) attributes {dimension_semantics = [#tpu.dimension_semantics<parallel>], iteration_bounds = array<i64: 1>, scalar_prefetch = 0 : i64, scratch_operands = 0 : i64, tpu.core_type = #tpu.core_type<tc>, window_params = [{transform_indices = @transform_0, window_bounds = array<i64: 16, 32>}, {pipeline_mode = #tpu.pipeline_mode<synchronous>, transform_indices = @transform_1, window_bounds = array<i64: 1, 32>}, {pipeline_mode = #tpu.pipeline_mode<synchronous>, transform_indices = @transform_2, window_bounds = array<i64: 1, 32>}, {transform_indices = @transform_3, window_bounds = array<i64: 16, 32>}]} {
    %c0 = arith.constant 0 : index
    %c0_0 = arith.constant 0 : index
    %0 = vector.load %arg1[%c0, %c0_0] : memref<16x32xf32, #tpu.memory_space<vmem>>, vector<16x32xf32>
    %cst = arith.constant dense<0.000000e+00> : vector<16xf32>
    %1 = vector.multi_reduction <add>, %0, %cst [1] : vector<16x32xf32> to vector<16xf32>
    %2 = vector.shape_cast %1 : vector<16xf32> to vector<16x1xf32>
    %cst_1 = arith.constant 3.200000e+01 : f32
    %3 = vector.broadcast %cst_1 : f32 to vector<16x1xf32>
    %4 = arith.divf %2, %3 : vector<16x1xf32>
    %5 = vector.broadcast %4 : vector<16x1xf32> to vector<16x32xf32>
    %6 = arith.subf %0, %5 : vector<16x32xf32>
    %7 = arith.mulf %6, %6 : vector<16x32xf32>
    %cst_2 = arith.constant dense<0.000000e+00> : vector<16xf32>
    %8 = vector.multi_reduction <add>, %7, %cst_2 [1] : vector<16x32xf32> to vector<16xf32>
    %9 = vector.shape_cast %8 : vector<16xf32> to vector<16x1xf32>
    %cst_3 = arith.constant 0.0322580636 : f32
    %10 = vector.broadcast %cst_3 : f32 to vector<16x1xf32>
    %11 = arith.mulf %9, %10 : vector<16x1xf32>
    %12 = math.sqrt %11 : vector<16x1xf32>
    %cst_4 = arith.constant 9.99999997E-7 : f32
    %13 = vector.broadcast %cst_4 : f32 to vector<16x1xf32>
    %14 = arith.addf %12, %13 : vector<16x1xf32>
    %cst_5 = arith.constant 1.000000e+00 : f32
    %15 = vector.broadcast %cst_5 : f32 to vector<16x1xf32>
    %16 = arith.divf %15, %14 : vector<16x1xf32>
    %17 = vector.broadcast %16 : vector<16x1xf32> to vector<16x32xf32>
    %18 = arith.mulf %6, %17 : vector<16x32xf32>
    %c0_6 = arith.constant 0 : index
    %c0_7 = arith.constant 0 : index
    %19 = vector.load %arg2[%c0_6, %c0_7] : memref<1x32xf32, #tpu.memory_space<vmem>>, vector<1x32xf32>
    %20 = vector.broadcast %19 : vector<1x32xf32> to vector<16x32xf32>
    %21 = arith.mulf %18, %20 : vector<16x32xf32>
    %c0_8 = arith.constant 0 : index
    %c0_9 = arith.constant 0 : index
    %22 = vector.load %arg3[%c0_8, %c0_9] : memref<1x32xf32, #tpu.memory_space<vmem>>, vector<1x32xf32>
    %23 = vector.broadcast %22 : vector<1x32xf32> to vector<16x32xf32>
    %24 = arith.addf %21, %23 : vector<16x32xf32>
    %c0_10 = arith.constant 0 : index
    %c0_11 = arith.constant 0 : index
    %25 = vector.load %arg4[%c0_10, %c0_11] : memref<16x32xf32, #tpu.memory_space<vmem>>, vector<16x32xf32>
    tpu.vector_store %arg4[%c0_10, %c0_11], %24 {strides = array<i32>} : memref<16x32xf32, #tpu.memory_space<vmem>>, vector<16x32xf32>,
    return
  }
  func.func @transform_0(%arg0: i32) -> (i32, i32) {
    %c0_i32 = arith.constant 0 : i32
    %c0_i32_0 = arith.constant 0 : i32
    return %arg0, %c0_i32 : i32, i32
  }
  func.func @transform_1(%arg0: i32) -> (i32, i32) {
    %c0_i32 = arith.constant 0 : i32
    %c0_i32_0 = arith.constant 0 : i32
    %c0_i32_1 = arith.constant 0 : i32
    return %c0_i32, %c0_i32_0 : i32, i32
  }
  func.func @transform_2(%arg0: i32) -> (i32, i32) {
    %c0_i32 = arith.constant 0 : i32
    %c0_i32_0 = arith.constant 0 : i32
    %c0_i32_1 = arith.constant 0 : i32
    return %c0_i32, %c0_i32_0 : i32, i32
  }
  func.func @transform_3(%arg0: i32) -> (i32, i32) {
    %c0_i32 = arith.constant 0 : i32
    %c0_i32_0 = arith.constant 0 : i32
    return %arg0, %c0_i32 : i32, i32
  }
}

</mosaic_0001>

<llo_original>
// kernel: tpu_custom_call.1
$region0: #{tpu_custom_call.1}
  #allocation0 [shape = 'u32[]', space=smem, size = 0x4, offset = 0x4, fixed_abs, tag = 'smem constant byte address 0x4 - core index']
  #allocation1 [shape = 'u32[144,128]{1,0:T(1,128)}', space=vmem, size = 0x12000, scoped, tag = 'internal scratch']
  %s0 = inlined_call_operand.hbm [shape: f32[16,32], index: 0, kind: input, shape index: {}]
  %s1 = inlined_call_operand.vmem [shape: f32[1,32], index: 1, kind: input, shape index: {}]
  %s2 = inlined_call_operand.vmem [shape: f32[1,32], index: 2, kind: input, shape index: {}]
  %s3 = inlined_call_operand.hbm [shape: f32[16,32], index: 3, kind: output, shape index: {}]
  %s4 = sld [smem:[#allocation0]]
  $region26: #{tpu_custom_call.1} parent=0
    _
  %s6 = ssub.s32 1, %s4
  %s7 = scalar_select 0, %s6, %s4
  $region1: #{tpu_custom_call.1} parent=0
    #allocation2 [shape = 'u8[8192]{0}', space=vmem, size = 0x2000, scoped, tag = 'input window, operand 0, single buffered']
    #allocation3 [shape = 's32[1]{0}', space=sflag, size = 0x4, scoped, tag = 'scoped memory for tpu_custom_call.1']
    #allocation4 [shape = 's32[1]{0}', space=sflag, size = 0x4, scoped, tag = 'scoped memory for tpu_custom_call.1']
    #allocation5 [shape = 'u8[8192]{0}', space=vmem, size = 0x2000, scoped, tag = 'output window, operand 0, single buffered']
    %8 = vsyncpa [#allocation3], 0
    %9 = vsyncpa [#allocation4], 0
    // Predicated region
    $region2: #{tpu_custom_call.1} parent=1 // pred_check
      _
    $region3: #{tpu_custom_call.1} parent=1 // pred_check_branch
      %11 = sbr.rel (0) target = $region5
    $region4: #{tpu_custom_call.1} parent=1 // pred_region
      %s13 = ssub.s32 256, 256
      %14 = vsyncadd [#allocation3], %s13
      %s15 = sshll.u32 [#allocation2], 4
      %s16 = int_to_ptr.vmem [resolvable:$true] %s15
      %21 = dma.hbm_to_vmem [thread:$0]  %s0, 256, %s16, [#allocation3], 128, 128, 8
    $region5: #{tpu_custom_call.1} parent=1 // pred_fallthru
      _
    // Predicated region
    $region6: #{tpu_custom_call.1} parent=1 // pred_check
      _
    $region7: #{tpu_custom_call.1} parent=1 // pred_check_branch
      %23 = sbr.rel (0) target = $region9
    $region8: #{tpu_custom_call.1} parent=1 // pred_region
      _
    $region9: #{tpu_custom_call.1} parent=1 // pred_fallthru
      _
    // Predicated region
    $region10: #{tpu_custom_call.1} parent=1 // pred_check
      _
    $region11: #{tpu_custom_call.1} parent=1 // pred_check_branch
      %25 = sbr.rel (0) target = $region13
    $region12: #{tpu_custom_call.1} parent=1 // pred_region
      _
    $region13: #{tpu_custom_call.1} parent=1 // pred_fallthru
      _
    // Predicated region
    $region14: #{tpu_custom_call.1} parent=1 // pred_check
      _
    $region15: #{tpu_custom_call.1} parent=1 // pred_check_branch
      %27 = sbr.rel (0) target = $region17
    $region16: #{tpu_custom_call.1} parent=1 // pred_region
      %28 = dma.done [#allocation3], 256
    $region17: #{tpu_custom_call.1} parent=1 // pred_fallthru
      _
    %v29 = vld [vmem:[#allocation2] sm:$0xff]
    %v30 = vld [vmem:[#allocation2 + $0x8] sm:$0xff]
    %vm31 = vcmask 261120
    %v32 = vsel %vm31, %v29, 0.0
    %33 = vadd.xlane.f32.xlu0 %v32
    %v34 = vpop.xlane.xlu0 %33
    %v35 = vsel %vm31, %v30, 0.0
    %36 = vadd.xlane.f32.xlu0 %v35
    %v37 = vpop.xlane.xlu0 %36
    %v38 = vrcp.pop 32.0
    %v39 = vmul.f32 %v34, %v38
    %v40 = vmul.f32 %v37, %v38
    %v41 = vsub.f32 %v29, %v39
    %v42 = vsub.f32 %v30, %v40
    %v43 = vmul.f32 %v41, %v41
    %v44 = vmul.f32 %v42, %v42
    %v45 = vsel %vm31, %v43, 0.0
    %46 = vadd.xlane.f32.xlu0 %v45
    %v47 = vpop.xlane.xlu0 %46
    %v48 = vsel %vm31, %v44, 0.0
    %49 = vadd.xlane.f32.xlu0 %v48
    %v50 = vpop.xlane.xlu0 %49
    %v51 = vmul.f32 %v47, 0.032258064
    %v52 = vmul.f32 %v50, 0.032258064
    %v53 = vrsqrt.pop %v51
    %v54 = vmul.f32 %v51, %v53
    %vm55 = vcmp.eq.f32.partialorder %v51, inf
    %v56 = vsel %vm55, %v51, %v54
    %vm57 = vcmp.eq.f32.partialorder %v51, 0.0
    %v58 = vand.u32 %v51, 2147483648
    %v59 = vsel %vm57, %v58, %v56
    %v60 = vrsqrt.pop %v52
    %v61 = vmul.f32 %v52, %v60
    %vm62 = vcmp.eq.f32.partialorder %v52, inf
    %v63 = vsel %vm62, %v52, %v61
    %vm64 = vcmp.eq.f32.partialorder %v52, 0.0
    %v65 = vand.u32 %v52, 2147483648
    %v66 = vsel %vm64, %v65, %v63
    %v67 = vadd.f32 %v59, 1e-06
    %v68 = vadd.f32 %v66, 1e-06
    %v69 = vrcp.pop %v67
    %v70 = vmul.f32 1.0, %v69
    %v71 = vrcp.pop %v68
    %v72 = vmul.f32 1.0, %v71
    %v73 = vmul.f32 %v41, %v70
    %v74 = vmul.f32 %v42, %v72
    %v75 = vld [vmem:[%s1] sm:$0x1]
    %v77 = vlaneseq
    %v78 = vshrl.u32 %v77, 7
    %v79 = vsub.s32 0, %v78
    %v80 = vrot.slane %v75, %v79
    %v82 = vmul.f32 %v73, %v80
    %v83 = vmul.f32 %v74, %v80
    %v84 = vld [vmem:[%s2] sm:$0x1]
    %v86 = vlaneseq
    %v87 = vshrl.u32 %v86, 7
    %v88 = vsub.s32 0, %v87
    %v89 = vrot.slane %v84, %v88
    %v91 = vadd.f32 %v82, %v89
    %v92 = vadd.f32 %v83, %v89
    %93 = vst.msk [vmem:[#allocation5] sm:$0xff] %vm31, %v91
    %94 = vst.msk [vmem:[#allocation5 + $0x8] sm:$0xff] %vm31, %v92
    // Predicated region
    $region18: #{tpu_custom_call.1} parent=1 // pred_check
      _
    $region19: #{tpu_custom_call.1} parent=1 // pred_check_branch
      %96 = sbr.rel (0) target = $region21
    $region20: #{tpu_custom_call.1} parent=1 // pred_region
      %s98 = ssub.s32 256, 256
      %99 = vsyncadd [#allocation4], %s98
      %s100 = sshll.u32 [#allocation5], 4
      %s101 = int_to_ptr.vmem [resolvable:$true] %s100
      %106 = dma.vmem_to_hbm [thread:$0]  %s101, 256, %s3, [#allocation4], 128, 128, 8
    $region21: #{tpu_custom_call.1} parent=1 // pred_fallthru
      _
    // Predicated region
    $region22: #{tpu_custom_call.1} parent=1 // pred_check
      _
    $region23: #{tpu_custom_call.1} parent=1 // pred_check_branch
      %108 = sbr.rel (0) target = $region25
    $region24: #{tpu_custom_call.1} parent=1 // pred_region
      %109 = dma.done [#allocation4], 256
    $region25: #{tpu_custom_call.1} parent=1 // pred_fallthru
      _
    %110 = vsyncpa [#allocation3], 1
    %111 = vsyncpa [#allocation4], 1

</llo_original>
